<compile_context>
chip_gen: v6e
topology: v6e:2x2x1
jax: 0.10.0
libtpu: 0.0.40
codegen_flags: <defaults>
</compile_context>

<pallas_src>
import functools

import numpy as np
import jax
import jax.numpy as jnp
from jax.experimental import pallas as pl
from jax.experimental.pallas import tpu as pltpu


# ----------------------------------------------------------------------------
# Pallas kernel: pointwise conv (channel matmul) + folded-BN bias + SiLU
# ----------------------------------------------------------------------------
def _focus_baseconv_kernel(x_ref, w_ref, bias_ref, o_ref):
    # x_ref:    (1, 12, T)    space-to-depth channels x spatial tile (lanes=T)
    # w_ref:    (Cout, 12)    1x1 conv weight with BN scale folded in
    # bias_ref: (Cout, 1)     folded BN bias (broadcast along lanes)
    # o_ref:    (1, Cout, T)  lane-dense output tile
    x = x_ref[0]                                                  # (12, T)
    w = w_ref[...]                                                # (Cout, 12)
    y = jnp.dot(w, x, preferred_element_type=jnp.float32)         # MXU, f32 acc
    y = y + bias_ref[...]                                         # BN bias
    y = y * jax.nn.sigmoid(y)                                     # SiLU (f32)
    o_ref[0] = y.astype(o_ref.dtype)                              # narrow at store


def focus_baseconv_pallas(x_sd, w_folded, bias, *, out_dtype, lane_tile=8192):
    """x_sd: (N, 12, HW); w_folded: (Cout, 12); bias: (Cout, 1) -> (N, Cout, HW).

    Fixed lane-dense spatial tile + cdiv grid (partial last block handled by
    Pallas).  `lane_tile` is a tuning knob; 2048-16384 are all fine, 8192 keeps
    DMAs large while staying at ~3 MiB/step double-buffered.
    """
    n, k, hw = x_sd.shape
    cout = w_folded.shape[0]

    # Pad the spatial (lane) dim to a multiple of 128 so every store is a
    # lane-dense, unmasked vst.  Typical YOLOX shapes are already multiples of
    # 128, so this branch is normally dead.
    hw_pad = pl.cdiv(hw, 128) * 128
    if hw_pad != hw:
        x_sd = jnp.pad(x_sd, ((0, 0), (0, 0), (0, hw_pad - hw)))

    tile = min(lane_tile, hw_pad)
    n_tiles = pl.cdiv(hw_pad, tile)

    in_itemsize = np.dtype(x_sd.dtype).itemsize
    out_itemsize = np.dtype(out_dtype).itemsize
    bytes_accessed = (n * k * hw_pad * in_itemsize
                      + cout * k * np.dtype(w_folded.dtype).itemsize
                      + cout * 4
                      + n * cout * hw_pad * out_itemsize)
    cost = pl.CostEstimate(
        flops=2 * n * hw_pad * k * cout + 3 * n * hw_pad * cout,
        transcendentals=n * hw_pad * cout,
        bytes_accessed=bytes_accessed,
    )

    y = pl.pallas_call(
        _focus_baseconv_kernel,
        out_shape=jax.ShapeDtypeStruct((n, cout, hw_pad), out_dtype),
        grid_spec=pltpu.PrefetchScalarGridSpec(
            num_scalar_prefetch=0,
            grid=(n, n_tiles),
            in_specs=[
                pl.BlockSpec((1, k, tile), lambda b, t: (b, 0, t)),
                pl.BlockSpec((cout, k), lambda b, t: (0, 0)),
                pl.BlockSpec((cout, 1), lambda b, t: (0, 0)),
            ],
            out_specs=pl.BlockSpec((1, cout, tile), lambda b, t: (b, 0, t)),
        ),
        compiler_params=pltpu.CompilerParams(
            dimension_semantics=("parallel", "parallel"),
            # Let XLA fuse the space-to-depth (+cast) producer of input 0 into
            # the kernel's input instead of a standalone materialization pass.
            allow_input_fusion=[True, False, False],
        ),
        cost_estimate=cost,
    )(x_sd, w_folded, bias)

    if hw_pad != hw:
        y = y[:, :, :hw]
    return y


# ----------------------------------------------------------------------------
# Focus forward (space-to-depth glue in plain JAX, hot path in Pallas)
# ----------------------------------------------------------------------------
def space_to_depth_focus(x):
    """Exact equivalent of the fixed-weight focus_conv (3->12, k=2, s=2).

    Output channel order matches the handcrafted weights:
      [c0..c2 @ (kh=0,kw=0)], [.. @ (1,0)], [.. @ (0,1)], [.. @ (1,1)]
    """
    tl = x[:, :, 0::2, 0::2]
    bl = x[:, :, 1::2, 0::2]
    tr = x[:, :, 0::2, 1::2]
    br = x[:, :, 1::2, 1::2]
    return jnp.concatenate([tl, bl, tr, br], axis=1)          # (N, 12, H/2, W/2)


def focus_forward(x, params, *, compute_dtype=jnp.float32, lane_tile=8192):
    """x: (N, 3, H, W) NCHW -> (N, Cout, H/2, W/2).  NCHW in/out, no transposes."""
    w, gamma, beta, rmean, rvar, eps = params                  # w: (Cout, 12)
    n, _, h, wd = x.shape
    ho, wo = h // 2, wd // 2
    cout = w.shape[0]

    # Cast BEFORE space-to-depth so the convert fuses into the single XLA
    # slice+concat pass (halves that pass's bytes in the bf16 path).
    # TODO(synk): fully fusing space-to-depth into the kernel (reading raw NCHW
    # x) needs an even/odd *lane* deinterleave in-kernel, which Mosaic has no
    # cheap strided-lane op for on 32-bit data; the repack therefore stays in
    # XLA, marked fusible into the kernel input via allow_input_fusion.
    xs = space_to_depth_focus(x.astype(compute_dtype)).reshape(n, 12, ho * wo)

    # Fold BatchNorm (inference running stats) into the conv weight + bias.
    scale = gamma / jnp.sqrt(rvar + eps)                       # (Cout,)
    w_folded = (w * scale[:, None]).astype(compute_dtype)      # (Cout, 12)
    bias = (beta - rmean * scale).reshape(cout, 1).astype(jnp.float32)

    y = focus_baseconv_pallas(xs, w_folded, bias,
                              out_dtype=compute_dtype,         # bf16 path stores bf16
                              lane_tile=lane_tile)             # (N, Cout, HW)
    return y.reshape(n, cout, ho, wo)                          # free reshape -> NCHW


# ----------------------------------------------------------------------------
# Reference (pure JAX) for verification
# ----------------------------------------------------------------------------
def focus_forward_ref(x, params):
    w, gamma, beta, rmean, rvar, eps = params                  # w: (Cout, 12)
    xs = space_to_depth_focus(x)                               # (N,12,Ho,Wo)
    y = jnp.einsum('nchw,oc->nohw', xs, w)                     # 1x1 conv
    scale = (gamma / jnp.sqrt(rvar + eps))[None, :, None, None]
    bias = (beta - rmean * gamma / jnp.sqrt(rvar + eps))[None, :, None, None]
    y = y * scale + bias
    return y * jax.nn.sigmoid(y)


# ----------------------------------------------------------------------------
if __name__ == "__main__":
    key = jax.random.PRNGKey(0)
    k_x, k_w, k_g, k_b, k_m, k_v = jax.random.split(key, 6)

    N, C_IN, H, W = 2, 3, 16, 16      # focus_conv is hardcoded 3 -> 12
    C_OUT = 32                        # Focus(in_channels=3, out_channels=32)
    EPS = 1e-5                        # nn.BatchNorm2d default

    # Input (NCHW, like PyTorch)
    x = jax.random.normal(k_x, (N, C_IN, H, W), dtype=jnp.float32)

    # BaseConv 1x1 conv weight: torch shape (C_OUT, 12, 1, 1) -> (C_OUT, 12)
    w_conv = jax.random.normal(k_w, (C_OUT, 12), dtype=jnp.float32) * 0.1
    # BatchNorm2d(C_OUT) params / running stats (deterministic synthetic init)
    gamma = 1.0 + 0.1 * jax.random.normal(k_g, (C_OUT,), dtype=jnp.float32)
    beta = 0.1 * jax.random.normal(k_b, (C_OUT,), dtype=jnp.float32)
    rmean = 0.1 * jax.random.normal(k_m, (C_OUT,), dtype=jnp.float32)
    rvar = jnp.abs(jax.random.normal(k_v, (C_OUT,), dtype=jnp.float32)) + 0.5
    # TODO(synk): BatchNorm uses inference (running-stats) semantics; PyTorch
    # train-mode batch statistics are not reproduced here.

    params = (w_conv, gamma, beta, rmean, rvar, EPS)

    ref = focus_forward_ref(x, params)

    # f32 path (matches PyTorch numerics)
    fwd_f32 = jax.jit(focus_forward)
    out = jax.block_until_ready(fwd_f32(x, params))
    np.testing.assert_allclose(np.asarray(out), np.asarray(ref),
                               rtol=1e-5, atol=1e-5)
    assert out.shape == (N, C_OUT, H // 2, W // 2)

    # bf16 HBM-traffic path (bf16 in, bf16 out, f32 MXU accumulation / f32 SiLU)
    fwd_bf16 = jax.jit(functools.partial(focus_forward,
                                         compute_dtype=jnp.bfloat16))
    out_bf16 = jax.block_until_ready(fwd_bf16(x, params))
    assert out_bf16.dtype == jnp.bfloat16
    np.testing.assert_allclose(np.asarray(out_bf16.astype(jnp.float32)),
                               np.asarray(ref), rtol=5e-2, atol=5e-2)

    print("KERNEL_OK")
</pallas_src>

<mosaic_0001>
module attributes {stable_mosaic.version = 11 : i64} {
  func.func @_focus_baseconv_kernel(%arg0: i32, %arg1: i32, %arg2: memref<1x12x128xf32, #tpu.memory_space<vmem>>, %arg3: memref<32x12xf32, #tpu.memory_space<vmem>>, %arg4: memref<32x1xf32, #tpu.memory_space<vmem>>, %arg5: memref<1x32x128xf32, #tpu.memory_space<vmem>>) attributes {dimension_semantics = [#tpu.dimension_semantics<parallel>, #tpu.dimension_semantics<parallel>], iteration_bounds = array<i64: 2, 1>, scalar_prefetch = 0 : i64, scratch_operands = 0 : i64, tpu.core_type = #tpu.core_type<tc>, window_params = [{transform_indices = @transform_0, window_bounds = array<i64: 1, 12, 128>}, {pipeline_mode = #tpu.pipeline_mode<synchronous>, transform_indices = @transform_1, window_bounds = array<i64: 32, 12>}, {pipeline_mode = #tpu.pipeline_mode<synchronous>, transform_indices = @transform_2, window_bounds = array<i64: 32, 1>}, {transform_indices = @transform_3, window_bounds = array<i64: 1, 32, 128>}]} {
    %c0 = arith.constant 0 : index
    %c0_0 = arith.constant 0 : index
    %c0_1 = arith.constant 0 : index
    %0 = vector.load %arg2[%c0, %c0_0, %c0_1] : memref<1x12x128xf32, #tpu.memory_space<vmem>>, vector<1x12x128xf32>
    %1 = vector.shape_cast %0 : vector<1x12x128xf32> to vector<12x128xf32>
    %c0_2 = arith.constant 0 : index
    %c0_3 = arith.constant 0 : index
    %2 = vector.load %arg3[%c0_2, %c0_3] : memref<32x12xf32, #tpu.memory_space<vmem>>, vector<32x12xf32>
    %cst = arith.constant dense<0.000000e+00> : vector<32x128xf32>
    %3 = tpu.matmul %2, %1, %cst {dimension_numbers = #tpu.dot_dimension_numbers<[1], [0], [0], [1], [0, 0, 1, 1], [], []>} : vector<32x12xf32>, vector<12x128xf32>, vector<32x128xf32> -> vector<32x128xf32>
    %c0_4 = arith.constant 0 : index
    %c0_5 = arith.constant 0 : index
    %4 = vector.load %arg4[%c0_4, %c0_5] : memref<32x1xf32, #tpu.memory_space<vmem>>, vector<32x1xf32>
    %5 = vector.broadcast %4 : vector<32x1xf32> to vector<32x128xf32>
    %6 = arith.addf %3, %5 : vector<32x128xf32>
    %7 = arith.negf %6 : vector<32x128xf32>
    %8 = math.exp %7 : vector<32x128xf32>
    %cst_6 = arith.constant 1.000000e+00 : f32
    %9 = vector.broadcast %cst_6 : f32 to vector<32x128xf32>
    %10 = arith.addf %9, %8 : vector<32x128xf32>
    %11 = arith.divf %9, %10 : vector<32x128xf32>
    %12 = arith.mulf %6, %11 : vector<32x128xf32>
    %c0_7 = arith.constant 0 : index
    %c0_8 = arith.constant 0 : index
    %c0_9 = arith.constant 0 : index
    %13 = vector.load %arg5[%c0_7, %c0_8, %c0_9] : memref<1x32x128xf32, #tpu.memory_space<vmem>>, vector<1x32x128xf32>
    %14 = vector.shape_cast %13 : vector<1x32x128xf32> to vector<32x128xf32>
    %15 = vector.shape_cast %12 : vector<32x128xf32> to vector<1x32x128xf32>
    tpu.vector_store %arg5[%c0_7, %c0_8, %c0_9], %15 {strides = array<i32>} : memref<1x32x128xf32, #tpu.memory_space<vmem>>, vector<1x32x128xf32>,
    return
  }
  func.func @transform_0(%arg0: i32, %arg1: i32) -> (i32, i32, i32) {
    %c0_i32 = arith.constant 0 : i32
    %c0_i32_0 = arith.constant 0 : i32
    return %arg0, %c0_i32, %arg1 : i32, i32, i32
  }
  func.func @transform_1(%arg0: i32, %arg1: i32) -> (i32, i32) {
    %c0_i32 = arith.constant 0 : i32
    %c0_i32_0 = arith.constant 0 : i32
    %c0_i32_1 = arith.constant 0 : i32
    return %c0_i32, %c0_i32_0 : i32, i32
  }
  func.func @transform_2(%arg0: i32, %arg1: i32) -> (i32, i32) {
    %c0_i32 = arith.constant 0 : i32
    %c0_i32_0 = arith.constant 0 : i32
    %c0_i32_1 = arith.constant 0 : i32
    return %c0_i32, %c0_i32_0 : i32, i32
  }
  func.func @transform_3(%arg0: i32, %arg1: i32) -> (i32, i32, i32) {
    %c0_i32 = arith.constant 0 : i32
    %c0_i32_0 = arith.constant 0 : i32
    return %arg0, %c0_i32, %arg1 : i32, i32, i32
  }
}

</mosaic_0001>

<llo_original>
// kernel: focus_forward.2
$region0: #{focus_forward.2}
  #allocation0 [shape = 'u32[]', space=smem, size = 0x4, offset = 0x4, fixed_abs, tag = 'smem constant byte address 0x4 - core index']
  #allocation1 [shape = 'u32[144,128]{1,0:T(1,128)}', space=vmem, size = 0x12000, scoped, tag = 'internal scratch']
  #allocation2 [shape = 'u32[2048]{0}', space=vmem, size = 0x2000, scoped, tag = 'scoped memory for focus_forward.2']
  #allocation3 [shape = 'u32[2048]{0}', space=vmem, size = 0x2000, scoped, tag = 'scoped memory for focus_forward.2']
  #allocation4 [shape = 'u32[2048]{0}', space=vmem, size = 0x2000, scoped, tag = 'scoped memory for focus_forward.2']
  #allocation5 [shape = 'u32[2048]{0}', space=vmem, size = 0x2000, scoped, tag = 'scoped memory for focus_forward.2']
  #allocation6 [shape = 'u32[2048]{0}', space=vmem, size = 0x2000, scoped, tag = 'scoped memory for focus_forward.2']
  %s0 = inlined_call_operand.vmem [shape: f32[32,12], index: 0, kind: input, shape index: {}]
  %s1 = inlined_call_operand.vmem [shape: f32[32,1], index: 1, kind: input, shape index: {}]
  %s2 = inlined_call_operand.vmem [shape: f32[2,12,64], index: 2, kind: input, shape index: {}]
  %s3 = inlined_call_operand.<no memory space> [shape: f32[], index: 3, kind: input, shape index: {}]
  %s4 = inlined_call_operand.vmem [shape: f32[2,32,128], index: 4, kind: output, shape index: {}]
  %s5 = sld [smem:[#allocation0]]
  $region45: #{focus_forward.2} parent=0
    _
  %s7 = ssub.s32 1, %s5
  %s8 = scalar_select 0, %s7, %s5
  %v9 = vstv %s3
  loop: start=0, step=1, limit=4
  $region2: #{focus_forward.2} parent=0 // loop_pre_header
    _
  $region3: #{focus_forward.2} parent=0 // loop_header
    %s11 = sphi 0, %s15
    %p12 = scmp.ge.s32.totalorder %s11, 4
    %s18 = sphi 0, %s30
    %s19 = sphi 0, %s26
    %s20 = sphi 0, %s18
    %s21 = sphi 0, %s19
    %s22 = sphi 0, %s20
    %s23 = sphi 0, %s21
    %s35 = sphi 0, %s37
    %s38 = sphi 0, %s35
    %s39 = sphi 0, %s38
    %s55 = sphi 0, %s39
    %s59 = sphi 0, %s59
    %s61 = sphi 0, %s59
    %s62 = sphi 0, %s61
    %s76 = sphi 0, %s62
    %s80 = sphi 0, %s80
    %s82 = sphi 0, %s80
    %s83 = sphi 0, %s82
    %s97 = sphi 0, %s83
    %s105 = sphi 0, %s107
    %s108 = sphi 0, %s105
    %s109 = sphi 0, %s108
    %s125 = sphi 0, %s109
  $region4: #{focus_forward.2} parent=0 // loop_header_branch
    %14 = sbr.rel (%p12) target = $region8
  $region5: #{focus_forward.2} parent=0 // loop_body
    %s16 = ssub.s32 %s11, 1
    %s17 = ssub.s32 %s11, 2
    %s24 = sadd.s32 1, %s19
    %p25 = scmp.ge.s32.totalorder %s24, 1
    %s26 = scalar_select %p25, 0, %s24
    %s27 = sadd.s32 1, %s18
    %s28 = scalar_select %p25, %s27, %s18
    %p29 = scmp.ge.s32.totalorder %s28, 2
    %s30 = scalar_select %p29, 0, %s28
    %s31 = ssub.s32 %s18, %s30
    %s32 = ssub.s32 %s19, %s26
    %s33 = sor.u32 %s31, %s32
    %p34 = scmp.eq.s32.totalorder %s33, 0
    %s36 = sadd.s32 %s35, 1
    %s37 = scalar_select %p34, %s35, %s36
    %p40 = pneg %p34
    %p41 = scmp.eq.s32.totalorder %s11, 1
    %p42 = por %p40, %p41
    %p43 = scmp.ne.s32.totalorder %s35, %s38
    %p44 = scmp.eq.s32.totalorder %s11, 0
    %p45 = por %p43, %p44
    %p46 = scmp.ne.s32.totalorder %s35, %s38
    %p47 = scmp.eq.s32.totalorder %s16, 1
    %p48 = por %p46, %p47
    %p49 = scmp.ne.s32.totalorder %s38, %s39
    %p50 = scmp.eq.s32.totalorder %s16, 0
    %p51 = por %p49, %p50
    %p52 = scmp.ne.s32.totalorder %s38, %s39
    %p53 = scmp.eq.s32.totalorder %s17, 1
    %p54 = por %p52, %p53
    %p56 = scmp.ne.s32.totalorder %s39, %s55
    %p57 = scmp.eq.s32.totalorder %s17, 0
    %p58 = por %p56, %p57
    %s60 = sadd.s32 %s59, 1
    %p63 = scmp.eq.s32.totalorder %s11, 1
    %p64 = scmp.ne.s32.totalorder %s59, %s61
    %p65 = scmp.eq.s32.totalorder %s11, 0
    %p66 = por %p64, %p65
    %p67 = scmp.ne.s32.totalorder %s59, %s61
    %p68 = scmp.eq.s32.totalorder %s16, 1
    %p69 = por %p67, %p68
    %p70 = scmp.ne.s32.totalorder %s61, %s62
    %p71 = scmp.eq.s32.totalorder %s16, 0
    %p72 = por %p70, %p71
    %p73 = scmp.ne.s32.totalorder %s61, %s62
    %p74 = scmp.eq.s32.totalorder %s17, 1
    %p75 = por %p73, %p74
    %p77 = scmp.ne.s32.totalorder %s62, %s76
    %p78 = scmp.eq.s32.totalorder %s17, 0
    %p79 = por %p77, %p78
    %s81 = sadd.s32 %s80, 1
    %p84 = scmp.eq.s32.totalorder %s11, 1
    %p85 = scmp.ne.s32.totalorder %s80, %s82
    %p86 = scmp.eq.s32.totalorder %s11, 0
    %p87 = por %p85, %p86
    %p88 = scmp.ne.s32.totalorder %s80, %s82
    %p89 = scmp.eq.s32.totalorder %s16, 1
    %p90 = por %p88, %p89
    %p91 = scmp.ne.s32.totalorder %s82, %s83
    %p92 = scmp.eq.s32.totalorder %s16, 0
    %p93 = por %p91, %p92
    %p94 = scmp.ne.s32.totalorder %s82, %s83
    %p95 = scmp.eq.s32.totalorder %s17, 1
    %p96 = por %p94, %p95
    %p98 = scmp.ne.s32.totalorder %s83, %s97
    %p99 = scmp.eq.s32.totalorder %s17, 0
    %p100 = por %p98, %p99
    %s101 = ssub.s32 %s18, %s30
    %s102 = ssub.s32 %s19, %s26
    %s103 = sor.u32 %s101, %s102
    %p104 = scmp.eq.s32.totalorder %s103, 0
    %s106 = sadd.s32 %s105, 1
    %s107 = scalar_select %p104, %s105, %s106
    %p110 = pneg %p104
    %p111 = scmp.eq.s32.totalorder %s11, 1
    %p112 = por %p110, %p111
    %p113 = scmp.ne.s32.totalorder %s105, %s108
    %p114 = scmp.eq.s32.totalorder %s11, 0
    %p115 = por %p113, %p114
    %p116 = scmp.ne.s32.totalorder %s105, %s108
    %p117 = scmp.eq.s32.totalorder %s16, 1
    %p118 = por %p116, %p117
    %p119 = scmp.ne.s32.totalorder %s108, %s109
    %p120 = scmp.eq.s32.totalorder %s16, 0
    %p121 = por %p119, %p120
    %p122 = scmp.ne.s32.totalorder %s108, %s109
    %p123 = scmp.eq.s32.totalorder %s17, 1
    %p124 = por %p122, %p123
    %p126 = scmp.ne.s32.totalorder %s109, %s125
    %p127 = scmp.eq.s32.totalorder %s17, 0
    %p128 = por %p126, %p127
    %p129 = scmp.le.s32.totalorder 1, %s11
    %p130 = scmp.lt.s32.totalorder %s11, 3
    %p131 = pnand %p129, %p130
    %p132 = pneg %p131
    // Predicated region
    $region9: #{focus_forward.2} parent=5 // pred_check
      _
    $region10: #{focus_forward.2} parent=5 // pred_check_branch
      %134 = sbr.rel (%p131) target = $region12
    $region11: #{focus_forward.2} parent=5 // pred_region
      %s135 = ssub.s32 %s11, 1
      // Predicated region
      $region13: #{focus_forward.2} parent=11 // pred_check
        %p136 = pneg %p72
      $region14: #{focus_forward.2} parent=11 // pred_check_branch
        %138 = sbr.rel (%p136) target = $region16
      $region15: #{focus_forward.2} parent=11 // pred_region
        _
      $region16: #{focus_forward.2} parent=11 // pred_fallthru
        _
      // Predicated region
      $region17: #{focus_forward.2} parent=11 // pred_check
        %p139 = pneg %p93
      $region18: #{focus_forward.2} parent=11 // pred_check_branch
        %141 = sbr.rel (%p139) target = $region20
      $region19: #{focus_forward.2} parent=11 // pred_region
        _
      $region20: #{focus_forward.2} parent=11 // pred_fallthru
        _
    $region12: #{focus_forward.2} parent=5 // pred_fallthru
      _
    %p142 = scmp.lt.s32.totalorder %s11, 2
    // Predicated region
    $region21: #{focus_forward.2} parent=5 // pred_check
      %p143 = pneg %p142
    $region22: #{focus_forward.2} parent=5 // pred_check_branch
      %145 = sbr.rel (%p143) target = $region24
    $region23: #{focus_forward.2} parent=5 // pred_region
      // Predicated region
      $region25: #{focus_forward.2} parent=23 // pred_check
        %p146 = pneg %p45
      $region26: #{focus_forward.2} parent=23 // pred_check_branch
        %148 = sbr.rel (%p146) target = $region28
      $region27: #{focus_forward.2} parent=23 // pred_region
        %s149 = ssub.s32 1, %s19
        %s150 = smul.u32 256, %s149
        %p151 = scmp.lt.s32.totalorder %s18, 1
        %s152 = scalar_select %p151, %s18, 1
        %p153 = scmp.lt.s32.totalorder %s19, 0
        %s154 = scalar_select %p153, %s19, 0
        %s155 = smul.addr %s152, 2
        %s156 = sadd.s32 %s154, %s155
        %s157 = smul.addr %s156, 8
        %s158 = scalar_lea.vmem %s2, %s157
        %s159 = ssub.s32 1, %s19
        %s160 = smul.u32 256, %s159
      $region28: #{focus_forward.2} parent=23 // pred_fallthru
        _
    $region24: #{focus_forward.2} parent=5 // pred_fallthru
      _
    %p161 = scmp.le.s32.totalorder 1, %s11
    %p162 = scmp.lt.s32.totalorder %s11, 3
    %p163 = pnand %p161, %p162
    %p164 = pneg %p163
    // Predicated region
    $region29: #{focus_forward.2} parent=5 // pred_check
      _
    $region30: #{focus_forward.2} parent=5 // pred_check_branch
      %166 = sbr.rel (%p163) target = $region32
    $region31: #{focus_forward.2} parent=5 // pred_region
      #allocation7 [shape = 'u8[8192]{0}', space=vmem, size = 0x2000, dematerialized = true, scoped, tag = 'FusionAdapter Buffer %fusion.1 = f32[2,12,128]{2,1,0:T(8,128)} fusion(%param_2.4, %param_3.4), kind=kLoop, calls=%fused_computation.2.clone, metadata={op_name="jit(focus_forward)/jit(_pad)/pad" stack_frame_id=22}']
      %s167 = ssub.s32 %s11, 1
      %s168 = ssub.s32 1, %s21
      %s169 = smul.u32 256, %s168
      %p170 = scmp.lt.s32.totalorder %s20, 1
      %s171 = scalar_select %p170, %s20, 1
      %p172 = scmp.lt.s32.totalorder %s21, 0
      %s173 = scalar_select %p172, %s21, 0
      %s174 = smul.addr %s171, 2
      %s175 = sadd.s32 %s173, %s174
      %s176 = smul.addr %s175, 8
      %s177 = scalar_lea.vmem %s2, %s176
      %p178 = pneg %p51
      %p179 = pneg %p48
      %p180 = pneg %p72
      %p181 = pneg %p69
      %p182 = pneg %p93
      %p183 = pneg %p90
      %p184 = pneg %p121
      %p185 = pneg %p118
      %p186 = scmp.lt.s32.totalorder %s20, 1
      %s187 = scalar_select %p186, %s20, 1
      %p188 = scmp.lt.s32.totalorder %s21, 0
      %s189 = scalar_select %p188, %s21, 0
      %s190 = smul.addr %s187, 4
      %s191 = sadd.s32 %s189, %s190
      %s192 = smul.addr %s191, 8
      %s193 = scalar_lea.vmem %s4, %s192
      %s194 = ssub.s32 1, %s21
      %s195 = smul.u32 256, %s194
      %p196 = scmp.lt.s32.totalorder %s20, 1
      %s197 = scalar_select %p196, %s20, 1
      %p198 = scmp.lt.s32.totalorder %s21, 0
      %s199 = scalar_select %p198, %s21, 0
      %s200 = smul.addr %s197, 2
      %s201 = sadd.s32 %s199, %s200
      %s202 = smul.addr %s201, 8
      %s203 = scalar_lea.vmem %s2, %s202
      %s204 = ssub.s32 1, %s21
      %s205 = smul.u32 256, %s204
      %p206 = scmp.lt.s32.totalorder %s20, 1
      %s207 = scalar_select %p206, %s20, 1
      %p208 = scmp.lt.s32.totalorder %s21, 0
      %s209 = scalar_select %p208, %s21, 0
      %s210 = smul.addr %s207, 4
      %s211 = sadd.s32 %s209, %s210
      %s212 = smul.addr %s211, 8
      %s213 = scalar_lea.vmem %s4, %s212
      %s214 = ssub.s32 0, %s21
      %p215 = scmp.lt.s32.totalorder %s214, 0
      %s216 = scalar_select %p215, 0, 255
      %v217 = vld [vmem:[%s203] sm:%s216]
      %s218 = ssub.s32 0, %s21
      %v219 = vstv %s218
      %vm220 = vcmp.lt.s32.totalorder %v219, 0
      %v221 = vsel %vm220, %v9, %v217
      %v222 = vlaneseq
      %v223 = vshrl.u32 %v222, 7
      %vm225 = vcmp.lt.s32.totalorder %v223, 12
      %v226 = vsel %vm225, %v221, %v9
      %s227 = smul.addr %s21, 128
      %v228 = vlaneseq
      %v229 = vand.u32 %v228, 127
      %v230 = vstv %s227
      %v231 = vadd.s32 %v229, %v230
      %vm232 = vcmp.lt.s32.totalorder %v231, 64
      %v233 = vsel %vm232, %v226, %v9
      %s235 = ssub.s32 256, 1
      %236 = vst [vmem:[#allocation7] sm:%s235] %v233
      %s237 = scalar_lea.vmem %s203, 8
      %s238 = ssub.s32 0, %s21
      %p239 = scmp.lt.s32.totalorder %s238, 0
      %s240 = scalar_select %p239, 0, 255
      %v241 = vld [vmem:[%s237] sm:%s240]
      %s242 = ssub.s32 0, %s21
      %v243 = vstv %s242
      %vm244 = vcmp.lt.s32.totalorder %v243, 0
      %v245 = vsel %vm244, %v9, %v241
      %v246 = vlaneseq
      %v247 = vshrl.u32 %v246, 7
      %v248 = vadd.s32 %v247, 8
      %vm249 = vcmp.lt.s32.totalorder %v248, 12
      %v250 = vsel %vm249, %v245, %v9
      %s251 = smul.addr %s21, 128
      %v252 = vlaneseq
      %v253 = vand.u32 %v252, 127
      %v254 = vstv %s251
      %v255 = vadd.s32 %v253, %v254
      %vm256 = vcmp.lt.s32.totalorder %v255, 64
      %v257 = vsel %vm256, %v250, %v9
      %s258 = scalar_lea.vmem [#allocation7], 8
      %s260 = ssub.s32 256, 1
      %261 = vst [vmem:[%s258] sm:%s260] %v257
      %v262 = vld [vmem:[#allocation7] sm:$0xff]
      %v263 = vld [vmem:[#allocation7 + $0x8] sm:$0xf]
      %v264 = vld [vmem:[%s0] sm:$0xff]
      %v265 = vld [vmem:[%s0 + $0x8] sm:$0xff]
      %v266 = vld [vmem:[%s0 + $0x10] sm:$0xff]
      %v267 = vld [vmem:[%s0 + $0x18] sm:$0xff]
      %v268 = vld [vmem:[%s1] sm:$0xff]
      %v269 = vld [vmem:[%s1 + $0x8] sm:$0xff]
      %v270 = vld [vmem:[%s1 + $0x10] sm:$0xff]
      %v271 = vld [vmem:[%s1 + $0x18] sm:$0xff]
      %273 = vset.pattern.permute.xlu0 0
      %274 = vperm.xlu0 %273, %v268
      %v275 = vpop.permute.xlu0 %274
      %278 = vset.pattern.permute.xlu0 0
      %279 = vperm.xlu0 %278, %v269
      %v280 = vpop.permute.xlu0 %279
      %283 = vset.pattern.permute.xlu0 0
      %284 = vperm.xlu0 %283, %v270
      %v285 = vpop.permute.xlu0 %284
      %288 = vset.pattern.permute.xlu0 0
      %289 = vperm.xlu0 %288, %v271
      %v290 = vpop.permute.xlu0 %289
      %vm292 = vcmask 97280
      %v294 = vsel %vm292, %v264, 0
      %v297 = vsel %vm292, %v265, 0
      %v300 = vsel %vm292, %v266, 0
      %v303 = vsel %vm292, %v267, 0
      %vm305 = vcmask 1043456
      %v307 = vsel %vm305, %v263, 0
      %309 = vmatprep.subr.mxu0 0.0
      %310 = vmatpush1.msra.mxu0 0.0
      %311 = vmatprep.subr.mxu0 0.0
      %312 = vmatpush1.msra.mxu0 0.0
      %313 = vmatprep.subr.mxu0 0.0
      %314 = vmatpush1.msra.mxu0 0.0
      %315 = vmatprep.subr.mxu0 0.0
      %316 = vmatpush1.msra.mxu0 0.0
      %317 = vmatprep.subr.mxu0 0.0
      %318 = vmatpush1.msra.mxu0 0.0
      %319 = vmatprep.subr.mxu0 0.0
      %320 = vmatpush1.msra.mxu0 0.0
      %321 = vmatprep.subr.mxu0 0.0
      %322 = vmatpush1.msra.mxu0 0.0
      %323 = vmatprep.subr.mxu0 0.0
      %324 = vmatpush1.msra.mxu0 0.0
      %325 = vmatprep.subr.mxu0 0.0
      %326 = vmatpush1.msra.mxu0 0.0
      %327 = vmatprep.subr.mxu0 0.0
      %328 = vmatpush1.msra.mxu0 0.0
      %329 = vmatprep.subr.mxu0 0.0
      %330 = vmatpush1.msra.mxu0 0.0
      %331 = vmatprep.subr.mxu0 0.0
      %332 = vmatpush1.msra.mxu0 0.0
      %333 = vmatprep.subr.mxu0 0.0
      %334 = vmatpush1.msra.mxu0 0.0
      %335 = vmatprep.subr.mxu0 0.0
      %336 = vmatpush1.msra.mxu0 0.0
      %337 = vmatprep.subr.mxu0 0.0
      %338 = vmatpush1.msra.mxu0 %v307
      %339 = vmatprep.subr.mxu0 0.0
      %340 = vmatpush1.msra.mxu0 %v262
      %341 = vmatprep.subr.mxu0 0.0
      %342 = vmatpush2.msra.mxu0 0.0
      %343 = vmatprep.subr.mxu0 0.0
      %344 = vmatpush2.msra.mxu0 0.0
      %345 = vmatprep.subr.mxu0 0.0
      %346 = vmatpush2.msra.mxu0 0.0
      %347 = vmatprep.subr.mxu0 0.0
      %348 = vmatpush2.msra.mxu0 0.0
      %349 = vmatprep.subr.mxu0 0.0
      %350 = vmatpush2.msra.mxu0 0.0
      %351 = vmatprep.subr.mxu0 0.0
      %352 = vmatpush2.msra.mxu0 0.0
      %353 = vmatprep.subr.mxu0 0.0
      %354 = vmatpush2.msra.mxu0 0.0
      %355 = vmatprep.subr.mxu0 0.0
      %356 = vmatpush2.msra.mxu0 0.0
      %357 = vmatprep.subr.mxu0 0.0
      %358 = vmatpush2.msra.mxu0 0.0
      %359 = vmatprep.subr.mxu0 0.0
      %360 = vmatpush2.msra.mxu0 0.0
      %361 = vmatprep.subr.mxu0 0.0
      %362 = vmatpush2.msra.mxu0 0.0
      %363 = vmatprep.subr.mxu0 0.0
      %364 = vmatpush2.msra.mxu0 0.0
      %365 = vmatprep.subr.mxu0 0.0
      %366 = vmatpush2.msra.mxu0 0.0
      %367 = vmatprep.subr.mxu0 0.0
      %368 = vmatpush2.msra.mxu0 0.0
      %369 = vmatprep.subr.mxu0 0.0
      %370 = vmatpush2.msra.mxu0 0.0
      %371 = vmatprep.subr.mxu0 0.0
      %372 = vmatpush2.msra.mxu0 0.0
      %373 = vmatprep.mubr.f32.mxu0 0.0
      %374 = vmatmul.mubr.f32.gmra.mxu0 %v294
      %v375 = vpop.f32.mrf.mxu0
      %v376 = vadd.f32 %v275, %v375
      %v377 = vpop.f32.mrf.mxu0
      %378 = vmatprep.mubr.f32.mxu0 0.0
      %379 = vmatmul.mubr.f32.gmra.mxu0 %v297
      %v380 = vpop.f32.mrf.mxu0
      %v381 = vadd.f32 %v280, %v380
      %v382 = vpop.f32.mrf.mxu0
      %383 = vmatprep.mubr.f32.mxu0 0.0
      %384 = vmatmul.mubr.f32.gmra.mxu0 %v300
      %v385 = vpop.f32.mrf.mxu0
      %v386 = vadd.f32 %v285, %v385
      %v387 = vpop.f32.mrf.mxu0
      %388 = vmatprep.mubr.f32.mxu0 0.0
      %389 = vmatmul.mubr.f32.gmra.mxu0 %v303
      %v390 = vpop.f32.mrf.mxu0
      %v391 = vadd.f32 %v290, %v390
      %v392 = vpop.f32.mrf.mxu0
      %393 = vdwg.mxu0
      %v394 = vxor.u32 %v376, 2147483648
      %v395 = vxor.u32 %v381, 2147483648
      %v396 = vxor.u32 %v386, 2147483648
      %v397 = vxor.u32 %v391, 2147483648
      %v398 = vmul.f32 %v394, 1.442695
      %v399 = vpow.pop %v398
      %v400 = vmul.f32 %v395, 1.442695
      %v401 = vpow.pop %v400
      %v402 = vmul.f32 %v396, 1.442695
      %v403 = vpow.pop %v402
      %v404 = vmul.f32 %v397, 1.442695
      %v405 = vpow.pop %v404
      %v406 = vadd.f32 %v399, 1.0
      %v407 = vadd.f32 %v401, 1.0
      %v408 = vadd.f32 %v403, 1.0
      %v409 = vadd.f32 %v405, 1.0
      %v410 = vrcp.pop %v406
      %v411 = vmul.f32 1.0, %v410
      %v412 = vrcp.pop %v407
      %v413 = vmul.f32 1.0, %v412
      %v414 = vrcp.pop %v408
      %v415 = vmul.f32 1.0, %v414
      %v416 = vrcp.pop %v409
      %v417 = vmul.f32 1.0, %v416
      %v418 = vmul.f32 %v376, %v411
      %v419 = vmul.f32 %v381, %v413
      %v420 = vmul.f32 %v386, %v415
      %v421 = vmul.f32 %v391, %v417
      %422 = vst [vmem:[%s213] sm:$0xff] %v418
      %423 = vst [vmem:[%s213 + $0x8] sm:$0xff] %v419
      %424 = vst [vmem:[%s213 + $0x10] sm:$0xff] %v420
      %425 = vst [vmem:[%s213 + $0x18] sm:$0xff] %v421
      %p426 = scmp.lt.s32.totalorder %s20, 1
      %s427 = scalar_select %p426, %s20, 1
      %p428 = scmp.lt.s32.totalorder %s21, 0
      %s429 = scalar_select %p428, %s21, 0
      %s430 = smul.addr %s427, 4
      %s431 = sadd.s32 %s429, %s430
      %s432 = smul.addr %s431, 8
      %s433 = scalar_lea.vmem %s4, %s432
      // Predicated region
      $region33: #{focus_forward.2} parent=31 // pred_check
        %p434 = pneg %p118
      $region34: #{focus_forward.2} parent=31 // pred_check_branch
        %436 = sbr.rel (%p434) target = $region36
      $region35: #{focus_forward.2} parent=31 // pred_region
        _
      $region36: #{focus_forward.2} parent=31 // pred_fallthru
        _
    $region32: #{focus_forward.2} parent=5 // pred_fallthru
      _
    %p437 = scmp.le.s32.totalorder 2, %s11
    // Predicated region
    $region37: #{focus_forward.2} parent=5 // pred_check
      %p438 = pneg %p437
    $region38: #{focus_forward.2} parent=5 // pred_check_branch
      %440 = sbr.rel (%p438) target = $region40
    $region39: #{focus_forward.2} parent=5 // pred_region
      %s441 = ssub.s32 %s11, 2
      // Predicated region
      $region41: #{focus_forward.2} parent=39 // pred_check
        %p442 = pneg %p124
      $region42: #{focus_forward.2} parent=39 // pred_check_branch
        %444 = sbr.rel (%p442) target = $region44
      $region43: #{focus_forward.2} parent=39 // pred_region
        %p445 = scmp.lt.s32.totalorder %s22, 1
        %s446 = scalar_select %p445, %s22, 1
        %p447 = scmp.lt.s32.totalorder %s23, 0
        %s448 = scalar_select %p447, %s23, 0
        %s449 = smul.addr %s446, 4
        %s450 = sadd.s32 %s448, %s449
        %s451 = smul.addr %s450, 8
        %s452 = scalar_lea.vmem %s4, %s451
      $region44: #{focus_forward.2} parent=39 // pred_fallthru
        _
    $region40: #{focus_forward.2} parent=5 // pred_fallthru
      _
  $region6: #{focus_forward.2} parent=0 // loop_footer
    %s15 = sadd.s32 1, %s11
  $region7: #{focus_forward.2} parent=0 // loop_footer_branch
    %10 = sbr.rel target = $region3
  $region8: #{focus_forward.2} parent=0 // loop_exit
    _

</llo_original>
